<compile_context>
chip_gen: v7x
topology: tpu7x:2x2x1
jax: 0.10.0
libtpu: 0.0.40
codegen_flags: <defaults>
</compile_context>

<pallas_src>
import functools

import jax
import jax.numpy as jnp
import numpy as np
from jax.experimental import pallas as pl
from jax.experimental.pallas import tpu as pltpu


# 64 MiB: above the default scoped limit on every generation, <= physical VMEM everywhere
# (v5e/v6e 128 MiB, v7x 64 MiB per TensorCore).
_VMEM_LIMIT_BYTES = 64 * 1024 * 1024


def _pick_tile(dim, pref, align=8):
    """Largest tile <= pref that divides dim, preferring multiples of `align`.

    Never silently returns a giant full-extent block for large non-divisible dims unless no
    divisor <= pref exists at all.
    """
    if dim <= pref:
        return dim
    t = (pref // align) * align
    while t >= align:
        if dim % t == 0:
            return t
        t -= align
    for t in range(min(pref, dim), 0, -1):  # no aligned divisor; take any divisor <= pref
        if dim % t == 0:
            return t
    return dim


# --------------------------------------------------------------------------------------
# Tiled matmul + bias:  out[M, N] = x[M, K] @ w[N, K].T + b[1, N]
# --------------------------------------------------------------------------------------
def _matmul_bias_kernel(x_ref, w_ref, b_ref, o_ref, acc_ref):
    k = pl.program_id(2)

    @pl.when(k == 0)
    def _():
        acc_ref[...] = jnp.zeros_like(acc_ref)

    # contract x's dim 1 with w's dim 1 (w kept in native (out, in) layout -> no host transpose)
    acc_ref[...] += jax.lax.dot_general(
        x_ref[...], w_ref[...],
        dimension_numbers=(((1,), (1,)), ((), ())),
        preferred_element_type=jnp.float32)

    @pl.when(k == pl.num_programs(2) - 1)
    def _():
        o_ref[...] = (acc_ref[...] + b_ref[...]).astype(o_ref.dtype)


def matmul_bias(x, w, b, *, tm=256, tn=256, tk=512):
    """x: (M, K), w: (N, K) [PyTorch Linear layout], b: (N,) -> (M, N)."""
    M, K = x.shape
    N, K2 = w.shape
    assert K == K2
    tm = _pick_tile(M, tm)
    tn = _pick_tile(N, tn, align=128)
    tk = _pick_tile(K, tk, align=128)
    b2 = b.reshape(1, N)

    return pl.pallas_call(
        _matmul_bias_kernel,
        out_shape=jax.ShapeDtypeStruct((M, N), x.dtype),
        grid_spec=pltpu.PrefetchScalarGridSpec(
            num_scalar_prefetch=0,
            grid=(M // tm, N // tn, K // tk),
            in_specs=[
                pl.BlockSpec((tm, tk), lambda i, j, k: (i, k)),
                pl.BlockSpec((tn, tk), lambda i, j, k: (j, k)),
                pl.BlockSpec((1, tn), lambda i, j, k: (0, j)),
            ],
            out_specs=pl.BlockSpec((tm, tn), lambda i, j, k: (i, j)),
            scratch_shapes=[pltpu.VMEM((tm, tn), jnp.float32)],
        ),
        compiler_params=pltpu.CompilerParams(
            dimension_semantics=("parallel", "parallel", "arbitrary"),
            vmem_limit_bytes=_VMEM_LIMIT_BYTES),
    )(x, w, b2)


# --------------------------------------------------------------------------------------
# Flash-attention forward (online softmax), q/k/v: (BH, S, Dh)
# Grid: (BH blocks [parallel], q blocks [parallel], kv blocks [arbitrary/reduction])
# --------------------------------------------------------------------------------------
def _flash_kernel(q_ref, k_ref, v_ref, o_ref, m_sc, l_sc, acc_sc, *, scale):
    kv = pl.program_id(2)

    @pl.when(kv == 0)
    def _():
        m_sc[...] = jnp.full_like(m_sc, -jnp.inf)
        l_sc[...] = jnp.zeros_like(l_sc)
        acc_sc[...] = jnp.zeros_like(acc_sc)

    # scale q (Dh-wide) rather than the (tq, tk) score tile
    q = q_ref[...] * scale
    s = jnp.einsum('bqd,bkd->bqk', q, k_ref[...],
                   preferred_element_type=jnp.float32)
    m_new = jnp.maximum(m_sc[...], s.max(-1, keepdims=True))
    a = jnp.exp(m_sc[...] - m_new)
    p = jnp.exp(s - m_new)
    l_sc[...] = a * l_sc[...] + p.sum(-1, keepdims=True)
    acc_sc[...] = a * acc_sc[...] + jnp.einsum(
        'bqk,bkd->bqd', p.astype(v_ref.dtype), v_ref[...],
        preferred_element_type=jnp.float32)
    m_sc[...] = m_new

    @pl.when(kv == pl.num_programs(2) - 1)
    def _():
        inv_l = pl.reciprocal(l_sc[...], approx=True)   # EUP slot, ~free
        o_ref[...] = (acc_sc[...] * inv_l).astype(o_ref.dtype)


def flash_attention(q, k, v, *, scale, bh_blk=8, tq=256, tk=256):
    BH, S, Dh = q.shape
    bh_blk = _pick_tile(BH, bh_blk, align=1)
    tq = _pick_tile(S, tq)
    tk = _pick_tile(S, tk)

    kernel = functools.partial(_flash_kernel, scale=scale)
    return pl.pallas_call(
        kernel,
        out_shape=jax.ShapeDtypeStruct((BH, S, Dh), q.dtype),
        grid_spec=pltpu.PrefetchScalarGridSpec(
            num_scalar_prefetch=0,
            grid=(BH // bh_blk, S // tq, S // tk),
            in_specs=[
                pl.BlockSpec((bh_blk, tq, Dh), lambda b, i, j: (b, i, 0)),
                pl.BlockSpec((bh_blk, tk, Dh), lambda b, i, j: (b, j, 0)),
                pl.BlockSpec((bh_blk, tk, Dh), lambda b, i, j: (b, j, 0)),
            ],
            out_specs=pl.BlockSpec((bh_blk, tq, Dh), lambda b, i, j: (b, i, 0)),
            scratch_shapes=[
                pltpu.VMEM((bh_blk, tq, 1), jnp.float32),
                pltpu.VMEM((bh_blk, tq, 1), jnp.float32),
                pltpu.VMEM((bh_blk, tq, Dh), jnp.float32),
            ],
        ),
        compiler_params=pltpu.CompilerParams(
            dimension_semantics=("parallel", "parallel", "arbitrary"),
            vmem_limit_bytes=_VMEM_LIMIT_BYTES),
    )(q, k, v)


# --------------------------------------------------------------------------------------
# Full module forward
# --------------------------------------------------------------------------------------
def semantic_self_attention_forward(x, in_proj_w, in_proj_b, out_proj_w, out_proj_b,
                                    num_heads, *, compute_dtype=None):
    """x: (L, N, E) [seq, batch, embed] exactly like nn.MultiheadAttention(batch_first=False).

    compute_dtype=jnp.bfloat16 runs the MXU-heavy kernels in bf16 (f32 accumulation) — the
    preferred mode on v6e/v7x.
    """
    L, N, E = x.shape
    H = num_heads
    assert E % H == 0
    Dh = E // H
    T = L * N
    orig_dtype = x.dtype

    if compute_dtype is not None:
        x = x.astype(compute_dtype)
        in_proj_w = in_proj_w.astype(compute_dtype)
        in_proj_b = in_proj_b.astype(compute_dtype)
        out_proj_w = out_proj_w.astype(compute_dtype)
        out_proj_b = out_proj_b.astype(compute_dtype)

    # 1) packed in-projection (Pallas tiled matmul)
    x2 = x.reshape(T, E)
    qkv = matmul_bias(x2, in_proj_w, in_proj_b)            # (T, 3E)
    q, k, v = jnp.split(qkv, 3, axis=-1)                   # each (T, E)

    # split heads: (L*N, E) -> (N*H, L, Dh), identical to PyTorch's view+transpose
    def to_heads(t):
        return t.reshape(L, N * H, Dh).transpose(1, 0, 2)

    qh, kh, vh = to_heads(q), to_heads(k), to_heads(v)

    # 2) scaled dot-product attention (scale applied to q inside the kernel)
    attn = flash_attention(qh, kh, vh, scale=float(Dh) ** -0.5)   # (N*H, L, Dh)

    # merge heads back: (N*H, L, Dh) -> (L, N*H, Dh) -> (L*N, E)
    attn = attn.transpose(1, 0, 2).reshape(T, E)

    # 3) out-projection (Pallas tiled matmul)
    out = matmul_bias(attn, out_proj_w, out_proj_b)        # (T, E)
    return out.reshape(L, N, E).astype(orig_dtype)


# --------------------------------------------------------------------------------------
# Plain-JAX reference mirroring torch.nn.MultiheadAttention forward
# --------------------------------------------------------------------------------------
def _reference(x, in_proj_w, in_proj_b, out_proj_w, out_proj_b, num_heads):
    L, N, E = x.shape
    H = num_heads
    Dh = E // H
    qkv = x @ in_proj_w.T + in_proj_b
    q, k, v = jnp.split(qkv, 3, axis=-1)
    q = q.reshape(L, N * H, Dh).transpose(1, 0, 2) * (float(Dh) ** -0.5)
    k = k.reshape(L, N * H, Dh).transpose(1, 0, 2)
    v = v.reshape(L, N * H, Dh).transpose(1, 0, 2)
    s = jnp.einsum('bqd,bkd->bqk', q, k)
    p = jax.nn.softmax(s, axis=-1)
    o = jnp.einsum('bqk,bkd->bqd', p, v)
    o = o.transpose(1, 0, 2).reshape(L * N, E)
    return (o @ out_proj_w.T + out_proj_b).reshape(L, N, E)


if __name__ == "__main__":
    key = jax.random.PRNGKey(0)
    L, N, E, H = 8, 2, 32, 4     # seq, batch, embed_dim, num_heads

    k1, k2, k3, k4, k5 = jax.random.split(key, 5)
    x = jax.random.normal(k1, (L, N, E), jnp.float32)
    in_proj_w = jax.random.normal(k2, (3 * E, E), jnp.float32) * (E ** -0.5)
    in_proj_b = jax.random.normal(k3, (3 * E,), jnp.float32) * 0.02
    out_proj_w = jax.random.normal(k4, (E, E), jnp.float32) * (E ** -0.5)
    out_proj_b = jax.random.normal(k5, (E,), jnp.float32) * 0.02

    ref = _reference(x, in_proj_w, in_proj_b, out_proj_w, out_proj_b, H)

    # f32 path (tolerance covers the EUP approximate-reciprocal softmax normalization)
    out = semantic_self_attention_forward(x, in_proj_w, in_proj_b,
                                          out_proj_w, out_proj_b, H)
    out = jax.block_until_ready(out)
    assert out.shape == (L, N, E)
    assert np.allclose(np.asarray(out), np.asarray(ref), rtol=1e-2, atol=1e-2)

    # bf16 compute path (v6e/v7x MXU-native); looser tolerance due to bf16 rounding.
    out_bf16 = semantic_self_attention_forward(x, in_proj_w, in_proj_b,
                                               out_proj_w, out_proj_b, H,
                                               compute_dtype=jnp.bfloat16)
    out_bf16 = jax.block_until_ready(out_bf16)
    assert np.allclose(np.asarray(out_bf16), np.asarray(ref), rtol=1e-1, atol=1e-1)

    # NOTE: the attention-weight output (second return of nn.MultiheadAttention) is discarded
    # by the module's forward, so it is intentionally not computed.
    print("KERNEL_OK")
</pallas_src>

<mosaic_0001>
module attributes {stable_mosaic.version = 11 : i64} {
  func.func @_matmul_bias_kernel(%arg0: i32, %arg1: i32, %arg2: i32, %arg3: memref<16x32xf32, #tpu.memory_space<vmem>>, %arg4: memref<96x32xf32, #tpu.memory_space<vmem>>, %arg5: memref<1x96xf32, #tpu.memory_space<vmem>>, %arg6: memref<16x96xf32, #tpu.memory_space<vmem>>, %arg7: memref<16x96xf32, #tpu.memory_space<vmem>>) attributes {dimension_semantics = [#tpu.dimension_semantics<parallel>, #tpu.dimension_semantics<parallel>, #tpu.dimension_semantics<arbitrary>], iteration_bounds = array<i64: 1, 1, 1>, scalar_prefetch = 0 : i64, scratch_operands = 1 : i64, tpu.core_type = #tpu.core_type<tc>, window_params = [{transform_indices = @transform_0, window_bounds = array<i64: 16, 32>}, {transform_indices = @transform_1, window_bounds = array<i64: 96, 32>}, {transform_indices = @transform_2, window_bounds = array<i64: 1, 96>}, {transform_indices = @transform_3, window_bounds = array<i64: 16, 96>}]} {
    %c0_i32 = arith.constant 0 : i32
    %0 = arith.cmpi eq, %arg2, %c0_i32 : i32
    %1 = arith.extui %0 : i1 to i32
    %c0_i32_0 = arith.constant 0 : i32
    %2 = arith.cmpi ne, %1, %c0_i32_0 : i32
    scf.if %2 {
      %cst_10 = arith.constant 0.000000e+00 : f32
      %12 = vector.broadcast %cst_10 : f32 to vector<16x96xf32>
      %c0_11 = arith.constant 0 : index
      %c0_12 = arith.constant 0 : index
      %13 = vector.load %arg7[%c0_11, %c0_12] : memref<16x96xf32, #tpu.memory_space<vmem>>, vector<16x96xf32>
      tpu.vector_store %arg7[%c0_11, %c0_12], %12 {strides = array<i32>} : memref<16x96xf32, #tpu.memory_space<vmem>>, vector<16x96xf32>,
    } else {
    }
    %c0 = arith.constant 0 : index
    %c0_1 = arith.constant 0 : index
    %3 = vector.load %arg7[%c0, %c0_1] : memref<16x96xf32, #tpu.memory_space<vmem>>, vector<16x96xf32>
    %c0_2 = arith.constant 0 : index
    %c0_3 = arith.constant 0 : index
    %4 = vector.load %arg3[%c0_2, %c0_3] : memref<16x32xf32, #tpu.memory_space<vmem>>, vector<16x32xf32>
    %c0_4 = arith.constant 0 : index
    %c0_5 = arith.constant 0 : index
    %5 = vector.load %arg4[%c0_4, %c0_5] : memref<96x32xf32, #tpu.memory_space<vmem>>, vector<96x32xf32>
    %cst = arith.constant dense<0.000000e+00> : vector<16x96xf32>
    %6 = tpu.matmul %4, %5, %cst {dimension_numbers = #tpu.dot_dimension_numbers<[1], [1], [0], [0], [0, 0, 1, 0], [], []>} : vector<16x32xf32>, vector<96x32xf32>, vector<16x96xf32> -> vector<16x96xf32>
    %7 = arith.addf %3, %6 : vector<16x96xf32>
    %c0_6 = arith.constant 0 : index
    %c0_7 = arith.constant 0 : index
    %8 = vector.load %arg7[%c0_6, %c0_7] : memref<16x96xf32, #tpu.memory_space<vmem>>, vector<16x96xf32>
    tpu.vector_store %arg7[%c0_6, %c0_7], %7 {strides = array<i32>} : memref<16x96xf32, #tpu.memory_space<vmem>>, vector<16x96xf32>,
    %c0_i32_8 = arith.constant 0 : i32
    %9 = arith.cmpi eq, %arg2, %c0_i32_8 : i32
    %10 = arith.extui %9 : i1 to i32
    %c0_i32_9 = arith.constant 0 : i32
    %11 = arith.cmpi ne, %10, %c0_i32_9 : i32
    scf.if %11 {
      %c0_10 = arith.constant 0 : index
      %c0_11 = arith.constant 0 : index
      %12 = vector.load %arg7[%c0_10, %c0_11] : memref<16x96xf32, #tpu.memory_space<vmem>>, vector<16x96xf32>
      %c0_12 = arith.constant 0 : index
      %c0_13 = arith.constant 0 : index
      %13 = vector.load %arg5[%c0_12, %c0_13] : memref<1x96xf32, #tpu.memory_space<vmem>>, vector<1x96xf32>
      %14 = vector.broadcast %13 : vector<1x96xf32> to vector<16x96xf32>
      %15 = arith.addf %12, %14 : vector<16x96xf32>
      %c0_14 = arith.constant 0 : index
      %c0_15 = arith.constant 0 : index
      %16 = vector.load %arg6[%c0_14, %c0_15] : memref<16x96xf32, #tpu.memory_space<vmem>>, vector<16x96xf32>
      tpu.vector_store %arg6[%c0_14, %c0_15], %15 {strides = array<i32>} : memref<16x96xf32, #tpu.memory_space<vmem>>, vector<16x96xf32>,
    } else {
    }
    return
  }
  func.func @transform_0(%arg0: i32, %arg1: i32, %arg2: i32) -> (i32, i32) {
    %c0_i32 = arith.constant 0 : i32
    return %arg0, %arg2 : i32, i32
  }
  func.func @transform_1(%arg0: i32, %arg1: i32, %arg2: i32) -> (i32, i32) {
    %c0_i32 = arith.constant 0 : i32
    return %arg1, %arg2 : i32, i32
  }
  func.func @transform_2(%arg0: i32, %arg1: i32, %arg2: i32) -> (i32, i32) {
    %c0_i32 = arith.constant 0 : i32
    %c0_i32_0 = arith.constant 0 : i32
    return %c0_i32, %arg1 : i32, i32
  }
  func.func @transform_3(%arg0: i32, %arg1: i32, %arg2: i32) -> (i32, i32) {
    %c0_i32 = arith.constant 0 : i32
    return %arg0, %arg1 : i32, i32
  }
}

</mosaic_0001>

<llo_original>
// kernel: tpu_custom_call.1
$region0: #{tpu_custom_call.1}
  #allocation0 [shape = 'u32[]', space=smem, size = 0x4, offset = 0x4, fixed_abs, tag = 'smem constant byte address 0x4 - core index']
  #allocation1 [shape = 'u32[144,128]{1,0:T(1,128)}', space=vmem, size = 0x12000, scoped, tag = 'internal scratch']
  #allocation2 [shape = 'f32[16,96]{1,0:T(8,128)}', space=vmem, size = 0x2000, scoped, tag = 'scratch operand']
  %s0 = inlined_call_operand.hbm [shape: f32[16,32], index: 0, kind: input, shape index: {}]
  %s1 = inlined_call_operand.hbm [shape: f32[96,32], index: 1, kind: input, shape index: {}]
  %s2 = inlined_call_operand.hbm [shape: f32[1,96], index: 2, kind: input, shape index: {}]
  %s3 = inlined_call_operand.hbm [shape: f32[16,96], index: 3, kind: output, shape index: {}]
  %s4 = sld [smem:[#allocation0]]
  $region42: #{tpu_custom_call.1} parent=0
    _
  %s6 = ssub.s32 1, %s4
  %s7 = scalar_select 0, %s6, %s4
  $region1: #{tpu_custom_call.1} parent=0
    #allocation3 [shape = 'u8[8192]{0}', space=vmem, size = 0x2000, scoped, tag = 'input window, operand 0, single buffered']
    #allocation4 [shape = 's32[1]{0}', space=sflag, size = 0x4, scoped, tag = 'scoped memory for tpu_custom_call.1']
    #allocation5 [shape = 's32[1]{0}', space=sflag, size = 0x4, scoped, tag = 'scoped memory for tpu_custom_call.1']
    #allocation6 [shape = 'u8[49152]{0}', space=vmem, size = 0xc000, scoped, tag = 'input window, operand 1, single buffered']
    #allocation7 [shape = 's32[1]{0}', space=sflag, size = 0x4, scoped, tag = 'scoped memory for tpu_custom_call.1']
    #allocation8 [shape = 'u8[512]{0}', space=vmem, size = 0x400, scoped, tag = 'input window, operand 2, single buffered']
    #allocation9 [shape = 'u8[8192]{0}', space=vmem, size = 0x2000, scoped, tag = 'output window, operand 0, single buffered']
    %8 = vsyncpa [#allocation4], 0
    %9 = vsyncpa [#allocation7], 0
    %10 = vsyncpa [#allocation5], 0
    // Predicated region
    $region2: #{tpu_custom_call.1} parent=1 // pred_check
      _
    $region3: #{tpu_custom_call.1} parent=1 // pred_check_branch
      %12 = sbr.rel (0) target = $region5
    $region4: #{tpu_custom_call.1} parent=1 // pred_region
      %s14 = ssub.s32 256, 256
      %15 = vsyncadd [#allocation4], %s14
      %s16 = sshll.u32 [#allocation3], 4
      %s17 = int_to_ptr.vmem [resolvable:$true] %s16
      %22 = dma.hbm_to_vmem [thread:$0]  %s0, 256, %s17, [#allocation4], 128, 128, 8
    $region5: #{tpu_custom_call.1} parent=1 // pred_fallthru
      _
    // Predicated region
    $region6: #{tpu_custom_call.1} parent=1 // pred_check
      _
    $region7: #{tpu_custom_call.1} parent=1 // pred_check_branch
      %24 = sbr.rel (0) target = $region9
    $region8: #{tpu_custom_call.1} parent=1 // pred_region
      %s26 = ssub.s32 1536, 1536
      %27 = vsyncadd [#allocation7], %s26
      %s28 = sshll.u32 [#allocation6], 4
      %s29 = int_to_ptr.vmem [resolvable:$true] %s28
      %34 = dma.hbm_to_vmem [thread:$0]  %s1, 1536, %s29, [#allocation7], 128, 128, 8
    $region9: #{tpu_custom_call.1} parent=1 // pred_fallthru
      _
    // Predicated region
    $region10: #{tpu_custom_call.1} parent=1 // pred_check
      _
    $region11: #{tpu_custom_call.1} parent=1 // pred_check_branch
      %36 = sbr.rel (0) target = $region13
    $region12: #{tpu_custom_call.1} parent=1 // pred_region
      %s38 = ssub.s32 16, 16
      %39 = vsyncadd [#allocation7], %s38
      %s41 = sshll.u32 [#allocation8], 4
      %s42 = int_to_ptr.vmem [resolvable:$true] %s41
      %44 = dma.hbm_to_vmem [thread:$0]  %s2, 16, %s42, [#allocation7]
    $region13: #{tpu_custom_call.1} parent=1 // pred_fallthru
      _
    // Predicated region
    $region14: #{tpu_custom_call.1} parent=1 // pred_check
      _
    $region15: #{tpu_custom_call.1} parent=1 // pred_check_branch
      %46 = sbr.rel (0) target = $region17
    $region16: #{tpu_custom_call.1} parent=1 // pred_region
      %47 = dma.done [#allocation4], 256
    $region17: #{tpu_custom_call.1} parent=1 // pred_fallthru
      _
    // Predicated region
    $region18: #{tpu_custom_call.1} parent=1 // pred_check
      _
    $region19: #{tpu_custom_call.1} parent=1 // pred_check_branch
      %49 = sbr.rel (0) target = $region21
    $region20: #{tpu_custom_call.1} parent=1 // pred_region
      %50 = dma.done [#allocation7], 1536
    $region21: #{tpu_custom_call.1} parent=1 // pred_fallthru
      _
    // Predicated region
    $region22: #{tpu_custom_call.1} parent=1 // pred_check
      _
    $region23: #{tpu_custom_call.1} parent=1 // pred_check_branch
      %52 = sbr.rel (0) target = $region25
    $region24: #{tpu_custom_call.1} parent=1 // pred_region
      %53 = dma.done [#allocation7], 16
    $region25: #{tpu_custom_call.1} parent=1 // pred_fallthru
      _
    %p54 = scmp.eq.s32.totalorder 0, 0
    // Predicated region
    $region26: #{tpu_custom_call.1} parent=1 // pred_check
      %p55 = pneg %p54
    $region27: #{tpu_custom_call.1} parent=1 // pred_check_branch
      %57 = sbr.rel (%p55) target = $region29
    $region28: #{tpu_custom_call.1} parent=1 // pred_region
      %vm58 = vcmask 785408
      %59 = vst.msk [vmem:[#allocation2] sm:$0xff] %vm58, 0.0
      %60 = vst.msk [vmem:[#allocation2 + $0x8] sm:$0xff] %vm58, 0.0
    $region29: #{tpu_custom_call.1} parent=1 // pred_fallthru
      _
    %v61 = vld [vmem:[#allocation2] sm:$0xff]
    %v62 = vld [vmem:[#allocation2 + $0x8] sm:$0xff]
    %v63 = vld [vmem:[#allocation3] sm:$0xff]
    %v64 = vld [vmem:[#allocation3 + $0x8] sm:$0xff]
    %v65 = vld [vmem:[#allocation6] sm:$0xff]
    %v66 = vld [vmem:[#allocation6 + $0x8] sm:$0xff]
    %v67 = vld [vmem:[#allocation6 + $0x10] sm:$0xff]
    %v68 = vld [vmem:[#allocation6 + $0x18] sm:$0xff]
    %v69 = vld [vmem:[#allocation6 + $0x20] sm:$0xff]
    %v70 = vld [vmem:[#allocation6 + $0x28] sm:$0xff]
    %v71 = vld [vmem:[#allocation6 + $0x30] sm:$0xff]
    %v72 = vld [vmem:[#allocation6 + $0x38] sm:$0xff]
    %v73 = vld [vmem:[#allocation6 + $0x40] sm:$0xff]
    %v74 = vld [vmem:[#allocation6 + $0x48] sm:$0xff]
    %v75 = vld [vmem:[#allocation6 + $0x50] sm:$0xff]
    %v76 = vld [vmem:[#allocation6 + $0x58] sm:$0xff]
    %vm77 = vcmask 261120
    %v79 = vsel %vm77, %v63, 0
    %v82 = vsel %vm77, %v64, 0
    %v85 = vsel %vm77, %v65, 0
    %v88 = vsel %vm77, %v66, 0
    %v91 = vsel %vm77, %v67, 0
    %v94 = vsel %vm77, %v68, 0
    %v97 = vsel %vm77, %v69, 0
    %v100 = vsel %vm77, %v70, 0
    %v103 = vsel %vm77, %v71, 0
    %v106 = vsel %vm77, %v72, 0
    %v109 = vsel %vm77, %v73, 0
    %v112 = vsel %vm77, %v74, 0
    %v115 = vsel %vm77, %v75, 0
    %v118 = vsel %vm77, %v76, 0
    %120 = vmatprep.subr.mxu0 0.0
    %121 = vmatpush1.xpose.msra.mxu0 %v85
    %122 = vmatprep.subr.mxu0 0.0
    %123 = vmatpush1.xpose.msra.mxu0 %v88
    %124 = vmatprep.subr.mxu0 0.0
    %125 = vmatpush1.xpose.msra.mxu0 %v91
    %126 = vmatprep.subr.mxu0 0.0
    %127 = vmatpush1.xpose.msra.mxu0 %v94
    %128 = vmatprep.subr.mxu0 0.0
    %129 = vmatpush1.xpose.msra.mxu0 %v97
    %130 = vmatprep.subr.mxu0 0.0
    %131 = vmatpush1.xpose.msra.mxu0 %v100
    %132 = vmatprep.subr.mxu0 0.0
    %133 = vmatpush1.xpose.msra.mxu0 %v103
    %134 = vmatprep.subr.mxu0 0.0
    %135 = vmatpush1.xpose.msra.mxu0 %v106
    %136 = vmatprep.subr.mxu0 0.0
    %137 = vmatpush1.xpose.msra.mxu0 %v109
    %138 = vmatprep.subr.mxu0 0.0
    %139 = vmatpush1.xpose.msra.mxu0 %v112
    %140 = vmatprep.subr.mxu0 0.0
    %141 = vmatpush1.xpose.msra.mxu0 %v115
    %142 = vmatprep.subr.mxu0 0.0
    %143 = vmatpush1.xpose.msra.mxu0 %v118
    %144 = vmatprep.subr.mxu0 0.0
    %145 = vmatpush1.xpose.msra.mxu0 0.0
    %146 = vmatprep.subr.mxu0 0.0
    %147 = vmatpush1.xpose.msra.mxu0 0.0
    %148 = vmatprep.subr.mxu0 0.0
    %149 = vmatpush1.xpose.msra.mxu0 0.0
    %150 = vmatprep.subr.mxu0 0.0
    %151 = vmatpush1.xpose.msra.mxu0 0.0
    %152 = vmatprep.subr.mxu0 0.0
    %153 = vmatpush1.xpose.msra.mxu0 0.0
    %154 = vmatprep.subr.mxu0 0.0
    %155 = vmatpush1.xpose.msra.mxu0 0.0
    %156 = vmatprep.subr.mxu0 0.0
    %157 = vmatpush1.xpose.msra.mxu0 0.0
    %158 = vmatprep.subr.mxu0 0.0
    %159 = vmatpush1.xpose.msra.mxu0 0.0
    %160 = vmatprep.subr.mxu0 0.0
    %161 = vmatpush1.xpose.msra.mxu0 0.0
    %162 = vmatprep.subr.mxu0 0.0
    %163 = vmatpush1.xpose.msra.mxu0 0.0
    %164 = vmatprep.subr.mxu0 0.0
    %165 = vmatpush1.xpose.msra.mxu0 0.0
    %166 = vmatprep.subr.mxu0 0.0
    %167 = vmatpush1.xpose.msra.mxu0 0.0
    %168 = vmatprep.subr.mxu0 0.0
    %169 = vmatpush1.xpose.msra.mxu0 0.0
    %170 = vmatprep.subr.mxu0 0.0
    %171 = vmatpush1.xpose.msra.mxu0 0.0
    %172 = vmatprep.subr.mxu0 0.0
    %173 = vmatpush1.xpose.msra.mxu0 0.0
    %174 = vmatprep.subr.mxu0 0.0
    %175 = vmatpush1.xpose.msra.mxu0 0.0
    %176 = vmatprep.subr.mxu0 0.0
    %177 = vmatpush1.xpose.msra.mxu0 0.0
    %178 = vmatprep.subr.mxu0 0.0
    %179 = vmatpush1.xpose.msra.mxu0 0.0
    %180 = vmatprep.subr.mxu0 0.0
    %181 = vmatpush1.xpose.msra.mxu0 0.0
    %182 = vmatprep.subr.mxu0 0.0
    %183 = vmatpush1.xpose.msra.mxu0 0.0
    %184 = vmatprep.mubr.f32.mxu0 0.0
    %185 = vmatmul.mubr.f32.gmra.mrb[0].mxu0 %v79
    %v186 = vpop.f32.mrb[0].mxu0
    %v187 = vadd.f32 0.0, %v186
    %v188 = vpop.f32.mrb[0].mxu0
    %189 = vmatprep.mubr.f32.mxu0 0.0
    %190 = vmatmul.mubr.f32.gmra.mrb[0].mxu0 %v82
    %v191 = vpop.f32.mrb[0].mxu0
    %v192 = vadd.f32 0.0, %v191
    %v193 = vpop.f32.mrb[0].mxu0
    %194 = vdwg.mxu0
    %v195 = vadd.f32 %v61, %v187
    %v196 = vadd.f32 %v62, %v192
    %vm197 = vcmask 785408
    %198 = vst.msk [vmem:[#allocation2] sm:$0xff] %vm197, %v195
    %199 = vst.msk [vmem:[#allocation2 + $0x8] sm:$0xff] %vm197, %v196
    // Predicated region
    $region30: #{tpu_custom_call.1} parent=1 // pred_check
      %p200 = pneg %p54
    $region31: #{tpu_custom_call.1} parent=1 // pred_check_branch
      %202 = sbr.rel (%p200) target = $region33
    $region32: #{tpu_custom_call.1} parent=1 // pred_region
      %v203 = vld [vmem:[#allocation2] sm:$0xff]
      %v204 = vld [vmem:[#allocation2 + $0x8] sm:$0xff]
      %v205 = vld [vmem:[#allocation8] sm:$0x1]
      %v207 = vlaneseq
      %v208 = vshrl.u32 %v207, 7
      %v209 = vsub.s32 0, %v208
      %v210 = vrot.slane %v205, %v209
      %v212 = vadd.f32 %v203, %v210
      %v213 = vadd.f32 %v204, %v210
      %214 = vst.msk [vmem:[#allocation9] sm:$0xff] %vm197, %v212
      %215 = vst.msk [vmem:[#allocation9 + $0x8] sm:$0xff] %vm197, %v213
    $region33: #{tpu_custom_call.1} parent=1 // pred_fallthru
      _
    // Predicated region
    $region34: #{tpu_custom_call.1} parent=1 // pred_check
      _
    $region35: #{tpu_custom_call.1} parent=1 // pred_check_branch
      %217 = sbr.rel (0) target = $region37
    $region36: #{tpu_custom_call.1} parent=1 // pred_region
      %s219 = ssub.s32 256, 256
      %220 = vsyncadd [#allocation5], %s219
      %s221 = sshll.u32 [#allocation9], 4
      %s222 = int_to_ptr.vmem [resolvable:$true] %s221
      %227 = dma.vmem_to_hbm [thread:$0]  %s222, 256, %s3, [#allocation5], 128, 128, 8
    $region37: #{tpu_custom_call.1} parent=1 // pred_fallthru
      _
    // Predicated region
    $region38: #{tpu_custom_call.1} parent=1 // pred_check
      _
    $region39: #{tpu_custom_call.1} parent=1 // pred_check_branch
      %229 = sbr.rel (0) target = $region41
    $region40: #{tpu_custom_call.1} parent=1 // pred_region
      %230 = dma.done [#allocation5], 256
    $region41: #{tpu_custom_call.1} parent=1 // pred_fallthru
      _
    %231 = vsyncpa [#allocation4], 1
    %232 = vsyncpa [#allocation7], 1
    %233 = vsyncpa [#allocation5], 1

</llo_original>
